<compile_context>
chip_gen: v6e
topology: v6e:2x2x1
jax: 0.10.0
libtpu: 0.0.40
codegen_flags: <defaults>
</compile_context>

<pallas_src>
import functools
import math

import jax
import jax.numpy as jnp
from jax import lax
from jax.experimental import pallas as pl
from jax.experimental.pallas import tpu as pltpu

_NEG_BIG = -1e30  # finite "minus infinity": avoids NaN on fully-masked rows


# --------------------------------------------------------------------------- #
# Helpers
# --------------------------------------------------------------------------- #
def _vmem_capacity_bytes():
    try:
        return int(pltpu.get_tpu_info().vmem_capacity_bytes)
    except Exception:
        return None


def _round_up(x, m):
    return ((x + m - 1) // m) * m


def _pick_tile(dim, target, mult):
    """Return (tile, padded_dim).

    If dim fits in the target, use the full dim as the block (no padding, always
    legal since block == full array dim). Otherwise pick a tile that is a
    multiple of `mult` (8 for sublane dims, 128 for lane dims) and pad the dim
    up to a multiple of that tile.
    """
    if dim <= target:
        return dim, dim
    t = max(mult, (target // mult) * mult)
    return t, _round_up(dim, t)


def _pick_query_tile_target(s_k, d_k, d_v, itemsize, vmem_cap, emit_attn):
    """Generation-aware query-tile target: fit double-buffered blocks + f32
    temps inside a fraction of the chip's VMEM."""
    cap = vmem_cap if vmem_cap is not None else 64 * 1024 * 1024
    # 128 MiB parts (v5e/v6e) can afford a larger share than v7x's 64 MiB.
    budget = int(cap * 0.7) if cap >= 96 * 1024 * 1024 else cap // 2

    def working_set(t):
        io = 2 * t * (d_k + d_v) * itemsize           # double-buffered Q / out blocks
        if emit_attn:
            io += 2 * t * s_k * itemsize              # double-buffered attn block
        kv = 2 * s_k * (d_k + d_v) * itemsize         # double-buffered K / V slabs
        tmp = 4 * t * s_k * 4                         # f32 scores/exp/weights temps
        return io + kv + tmp

    tq = 512
    while tq > 8 and working_set(tq) > budget:
        tq //= 2
    return max(tq, 8)


# --------------------------------------------------------------------------- #
# Scaled dot-product attention kernel
# --------------------------------------------------------------------------- #
def _sdpa_kernel(*refs, scale, has_bias, emit_attn):
    q_ref, k_ref, v_ref = refs[0], refs[1], refs[2]
    idx = 3
    bias_ref = None
    if has_bias:
        bias_ref = refs[idx]
        idx += 1
    out_ref = refs[idx]
    idx += 1
    attn_ref = refs[idx] if emit_attn else None

    # Fold 1/sqrt(d_k) into Q; MXU operands stay in the input dtype.
    q = q_ref[...] * jnp.asarray(scale, dtype=q_ref.dtype)

    # Q @ K^T without materializing K^T: contract over d_k directly.
    scores = lax.dot_general(
        q, k_ref[...],
        dimension_numbers=(((1,), (1,)), ((), ())),
        preferred_element_type=jnp.float32,
    )  # [TQ, S_k] f32

    if has_bias:
        scores = scores + bias_ref[...]   # additive 0 / -1e30 bias, broadcast rows

    # Numerically stable softmax in f32 (exact divide for reference parity).
    row_max = jnp.max(scores, axis=-1, keepdims=True)
    exp_scores = jnp.exp(scores - row_max)
    denom = jnp.sum(exp_scores, axis=-1, keepdims=True)
    weights = exp_scores / denom

    # Cast once, reuse for both the PV matmul and the attn store.
    w_lo = weights.astype(v_ref.dtype)
    out = jnp.dot(w_lo, v_ref[...], preferred_element_type=jnp.float32)
    out_ref[...] = out.astype(out_ref.dtype)

    if emit_attn:
        if attn_ref.dtype == v_ref.dtype:
            attn_ref[...] = w_lo
        else:
            attn_ref[...] = weights.astype(attn_ref.dtype)


def scaled_dot_product_attention(Q, K, V, mask=None, *, need_attn=True):
    """Pallas ScaledDotProductAttention.forward.

    Q: [B, H, S_q, d_k]; K: [B, H, S_k, d_k]; V: [B, H, S_k, d_v];
    mask: [B, 1, 1, S_k] (1 == masked) or None.
    Returns (output [B, H, S_q, d_v], attn [B, H, S_q, S_k] or None).
    """
    B, H, S_q, d_k = Q.shape
    S_k = K.shape[2]
    d_v = V.shape[-1]
    scale = 1.0 / math.sqrt(float(d_k))
    has_bias = mask is not None

    # Collapse (batch, head) into one grid axis to amortize per-step overhead.
    q3 = Q.reshape(B * H, S_q, d_k)
    k3 = K.reshape(B * H, S_k, d_k)
    v3 = V.reshape(B * H, S_k, d_v)

    vmem_cap = _vmem_capacity_bytes()
    tq_target = _pick_query_tile_target(S_k, d_k, d_v, Q.dtype.itemsize,
                                        vmem_cap, need_attn)
    tq, s_q_pad = _pick_tile(S_q, tq_target, 8)
    if s_q_pad != S_q:
        q3 = jnp.pad(q3, ((0, 0), (0, s_q_pad - S_q), (0, 0)))

    in_specs = [
        pl.BlockSpec((None, tq, d_k), lambda bh, qi: (bh, qi, 0)),
        pl.BlockSpec((None, S_k, d_k), lambda bh, qi: (bh, 0, 0)),
        pl.BlockSpec((None, S_k, d_v), lambda bh, qi: (bh, 0, 0)),
    ]
    inputs = [q3, k3, v3]
    if has_bias:
        bias = jnp.where(mask.reshape(B, 1, S_k) == 1,
                         jnp.float32(_NEG_BIG), jnp.float32(0.0))
        in_specs.append(pl.BlockSpec((None, 1, S_k), lambda bh, qi: (bh // H, 0, 0)))
        inputs.append(bias)

    out_struct = jax.ShapeDtypeStruct((B * H, s_q_pad, d_v), Q.dtype)
    out_spec = pl.BlockSpec((None, tq, d_v), lambda bh, qi: (bh, qi, 0))
    if need_attn:
        out_shape = (out_struct,
                     jax.ShapeDtypeStruct((B * H, s_q_pad, S_k), Q.dtype))
        out_specs = (out_spec,
                     pl.BlockSpec((None, tq, S_k), lambda bh, qi: (bh, qi, 0)))
    else:
        out_shape = out_struct
        out_specs = out_spec

    cp_kwargs = dict(dimension_semantics=("parallel", "parallel"))
    if vmem_cap is not None:
        cp_kwargs["vmem_limit_bytes"] = min(100 * 1024 * 1024, int(vmem_cap * 0.75))

    kernel = functools.partial(_sdpa_kernel, scale=scale,
                               has_bias=has_bias, emit_attn=need_attn)

    results = pl.pallas_call(
        kernel,
        out_shape=out_shape,
        grid_spec=pltpu.PrefetchScalarGridSpec(
            num_scalar_prefetch=0,
            grid=(B * H, s_q_pad // tq),
            in_specs=in_specs,
            out_specs=out_specs,
        ),
        compiler_params=pltpu.CompilerParams(**cp_kwargs),
    )(*inputs)

    if need_attn:
        out, attn = results
    else:
        out, attn = results, None

    out = out[:, :S_q, :].reshape(B, H, S_q, d_v)
    if attn is not None:
        attn = attn[:, :S_q, :].reshape(B, H, S_q, S_k)
    return out, attn


# --------------------------------------------------------------------------- #
# Tiled, bias-free matmul (W_Q / W_K / W_V / W_O projections)
# --------------------------------------------------------------------------- #
def _matmul_kernel(x_ref, w_ref, o_ref, acc_ref):
    @pl.when(pl.program_id(2) == 0)
    def _():
        acc_ref[...] = jnp.zeros_like(acc_ref)

    acc_ref[...] += jnp.dot(x_ref[...], w_ref[...],
                            preferred_element_type=jnp.float32)

    @pl.when(pl.program_id(2) == pl.num_programs(2) - 1)
    def _():
        o_ref[...] = acc_ref[...].astype(o_ref.dtype)


def _linear(x2d, w):
    """x2d: [M, K] @ w: [K, N] -> [M, N]; weight streamed tile-by-tile."""
    M, K = x2d.shape
    K2, N = w.shape
    assert K == K2
    tm, Mp = _pick_tile(M, 512, 8)
    tk, Kp = _pick_tile(K, 512, 128)
    tn, Np = _pick_tile(N, 512, 128)

    xp = x2d if (Mp == M and Kp == K) else jnp.pad(x2d, ((0, Mp - M), (0, Kp - K)))
    wp = w if (Kp == K and Np == N) else jnp.pad(w, ((0, Kp - K), (0, Np - N)))

    out = pl.pallas_call(
        _matmul_kernel,
        out_shape=jax.ShapeDtypeStruct((Mp, Np), x2d.dtype),
        grid_spec=pltpu.PrefetchScalarGridSpec(
            num_scalar_prefetch=0,
            grid=(Mp // tm, Np // tn, Kp // tk),
            in_specs=[
                pl.BlockSpec((tm, tk), lambda i, j, k: (i, k)),
                pl.BlockSpec((tk, tn), lambda i, j, k: (k, j)),
            ],
            out_specs=pl.BlockSpec((tm, tn), lambda i, j, k: (i, j)),
            scratch_shapes=[pltpu.VMEM((tm, tn), jnp.float32)],
        ),
        compiler_params=pltpu.CompilerParams(
            dimension_semantics=("parallel", "parallel", "arbitrary")),
    )(xp, wp)

    if Mp != M or Np != N:
        out = out[:M, :N]
    return out


# --------------------------------------------------------------------------- #
# MultiHeadAttention forward
# --------------------------------------------------------------------------- #
def multi_head_attention(x_q, x_k, x_v, params, *, n_head, d_k, d_v,
                         mask=None, need_attn=True):
    """Matches MultiHeadAttention.forward. Weights are stored [in, out] (PyTorch W^T)."""
    B, S_q, d_model = x_q.shape
    S_k = x_k.shape[1]
    nq = n_head * d_k

    # Fuse Q/K/V projections when they share an input (one HBM read of x).
    if x_q is x_k and x_k is x_v:
        w_qkv = jnp.concatenate([params["w_q"], params["w_k"], params["w_v"]], axis=1)
        qkv = _linear(x_q.reshape(B * S_q, d_model), w_qkv)
        q, k, v = qkv[:, :nq], qkv[:, nq:2 * nq], qkv[:, 2 * nq:]
    else:
        q = _linear(x_q.reshape(B * S_q, d_model), params["w_q"])
        if x_k is x_v:
            w_kv = jnp.concatenate([params["w_k"], params["w_v"]], axis=1)
            kv = _linear(x_k.reshape(B * S_k, d_model), w_kv)
            k, v = kv[:, :nq], kv[:, nq:]
        else:
            k = _linear(x_k.reshape(B * S_k, d_model), params["w_k"])
            v = _linear(x_v.reshape(B * S_k, d_model), params["w_v"])

    # TODO(synk): fold these head split/merge transposes into the SDPA BlockSpec
    # index_maps (valid when d_k/d_v are multiples of 128) to drop 4 HBM passes.
    q = q.reshape(B, S_q, n_head, d_k).transpose(0, 2, 1, 3)
    k = k.reshape(B, S_k, n_head, d_k).transpose(0, 2, 1, 3)
    v = v.reshape(B, S_k, n_head, d_v).transpose(0, 2, 1, 3)

    if mask is not None:
        mask = mask.reshape(B, 1, 1, S_k)  # == mask.unsqueeze(1)

    x, attn = scaled_dot_product_attention(q, k, v, mask=mask, need_attn=need_attn)

    x = x.transpose(0, 2, 1, 3).reshape(B * S_q, n_head * d_v)
    out = _linear(x, params["w_o"]).reshape(B, S_q, d_model)
    return out, attn


# --------------------------------------------------------------------------- #
# Pure-JAX reference for validation
# --------------------------------------------------------------------------- #
def _reference_mha(x_q, x_k, x_v, params, *, n_head, d_k, d_v, mask=None):
    B, S_q, d_model = x_q.shape
    S_k = x_k.shape[1]
    q = (x_q @ params["w_q"]).reshape(B, S_q, n_head, d_k).transpose(0, 2, 1, 3)
    k = (x_k @ params["w_k"]).reshape(B, S_k, n_head, d_k).transpose(0, 2, 1, 3)
    v = (x_v @ params["w_v"]).reshape(B, S_k, n_head, d_v).transpose(0, 2, 1, 3)
    scores = jnp.einsum("bhqd,bhkd->bhqk", q, k) / math.sqrt(float(d_k))
    if mask is not None:
        scores = jnp.where(mask.reshape(B, 1, 1, S_k) == 1, -jnp.inf, scores)
    w = jax.nn.softmax(scores, axis=-1)
    o = jnp.einsum("bhqk,bhkd->bhqd", w, v)
    o = o.transpose(0, 2, 1, 3).reshape(B, S_q, n_head * d_v)
    return o @ params["w_o"], w


if __name__ == "__main__":
    B, S, d_model, n_head, d_k, d_v = 2, 8, 32, 4, 16, 16

    key = jax.random.PRNGKey(0)
    kx, kq, kk, kv, ko, km = jax.random.split(key, 6)
    x = jax.random.normal(kx, (B, S, d_model), dtype=jnp.float32)
    params = {
        "w_q": jax.random.normal(kq, (d_model, n_head * d_k), jnp.float32) / math.sqrt(d_model),
        "w_k": jax.random.normal(kk, (d_model, n_head * d_k), jnp.float32) / math.sqrt(d_model),
        "w_v": jax.random.normal(kv, (d_model, n_head * d_v), jnp.float32) / math.sqrt(d_model),
        "w_o": jax.random.normal(ko, (n_head * d_v, d_model), jnp.float32) / math.sqrt(n_head * d_v),
    }
    # mask: 1 == masked key position; keep at least one key visible per row.
    mask = (jax.random.uniform(km, (B, 1, S)) < 0.25).astype(jnp.int32)
    mask = mask.at[..., 0].set(0)

    out, attn = multi_head_attention(x, x, x, params,
                                     n_head=n_head, d_k=d_k, d_v=d_v, mask=mask)
    jax.block_until_ready((out, attn))

    ref_out, ref_attn = _reference_mha(x, x, x, params,
                                       n_head=n_head, d_k=d_k, d_v=d_v, mask=mask)
    assert out.shape == (B, S, d_model) and attn.shape == (B, n_head, S, S)
    assert jnp.allclose(out, ref_out, atol=2e-3, rtol=2e-3), \
        float(jnp.max(jnp.abs(out - ref_out)))
    assert jnp.allclose(attn, ref_attn, atol=2e-3, rtol=2e-3), \
        float(jnp.max(jnp.abs(attn - ref_attn)))

    # Fast path without the attention-weights writeback (review item #1).
    out_fast, attn_none = multi_head_attention(x, x, x, params,
                                               n_head=n_head, d_k=d_k, d_v=d_v,
                                               mask=mask, need_attn=False)
    jax.block_until_ready(out_fast)
    assert attn_none is None
    assert jnp.allclose(out_fast, ref_out, atol=2e-3, rtol=2e-3), \
        float(jnp.max(jnp.abs(out_fast - ref_out)))

    print("KERNEL_OK")
</pallas_src>

<mosaic_0001>
module attributes {stable_mosaic.version = 11 : i64} {
  func.func @_matmul_kernel(%arg0: i32, %arg1: i32, %arg2: i32, %arg3: memref<16x32xf32, #tpu.memory_space<vmem>>, %arg4: memref<32x192xf32, #tpu.memory_space<vmem>>, %arg5: memref<16x192xf32, #tpu.memory_space<vmem>>, %arg6: memref<16x192xf32, #tpu.memory_space<vmem>>) attributes {dimension_semantics = [#tpu.dimension_semantics<parallel>, #tpu.dimension_semantics<parallel>, #tpu.dimension_semantics<arbitrary>], iteration_bounds = array<i64: 1, 1, 1>, scalar_prefetch = 0 : i64, scratch_operands = 1 : i64, tpu.core_type = #tpu.core_type<tc>, window_params = [{transform_indices = @transform_0, window_bounds = array<i64: 16, 32>}, {transform_indices = @transform_1, window_bounds = array<i64: 32, 192>}, {transform_indices = @transform_2, window_bounds = array<i64: 16, 192>}]} {
    %c0_i32 = arith.constant 0 : i32
    %0 = arith.cmpi eq, %arg2, %c0_i32 : i32
    %1 = arith.extui %0 : i1 to i32
    %c0_i32_0 = arith.constant 0 : i32
    %2 = arith.cmpi ne, %1, %c0_i32_0 : i32
    scf.if %2 {
      %cst_10 = arith.constant 0.000000e+00 : f32
      %12 = vector.broadcast %cst_10 : f32 to vector<16x192xf32>
      %c0_11 = arith.constant 0 : index
      %c0_12 = arith.constant 0 : index
      %13 = vector.load %arg6[%c0_11, %c0_12] : memref<16x192xf32, #tpu.memory_space<vmem>>, vector<16x192xf32>
      tpu.vector_store %arg6[%c0_11, %c0_12], %12 {strides = array<i32>} : memref<16x192xf32, #tpu.memory_space<vmem>>, vector<16x192xf32>,
    } else {
    }
    %c0 = arith.constant 0 : index
    %c0_1 = arith.constant 0 : index
    %3 = vector.load %arg6[%c0, %c0_1] : memref<16x192xf32, #tpu.memory_space<vmem>>, vector<16x192xf32>
    %c0_2 = arith.constant 0 : index
    %c0_3 = arith.constant 0 : index
    %4 = vector.load %arg3[%c0_2, %c0_3] : memref<16x32xf32, #tpu.memory_space<vmem>>, vector<16x32xf32>
    %c0_4 = arith.constant 0 : index
    %c0_5 = arith.constant 0 : index
    %5 = vector.load %arg4[%c0_4, %c0_5] : memref<32x192xf32, #tpu.memory_space<vmem>>, vector<32x192xf32>
    %cst = arith.constant dense<0.000000e+00> : vector<16x192xf32>
    %6 = tpu.matmul %4, %5, %cst {dimension_numbers = #tpu.dot_dimension_numbers<[1], [0], [0], [1], [0, 0, 1, 1], [], []>} : vector<16x32xf32>, vector<32x192xf32>, vector<16x192xf32> -> vector<16x192xf32>
    %7 = arith.addf %3, %6 : vector<16x192xf32>
    %c0_6 = arith.constant 0 : index
    %c0_7 = arith.constant 0 : index
    %8 = vector.load %arg6[%c0_6, %c0_7] : memref<16x192xf32, #tpu.memory_space<vmem>>, vector<16x192xf32>
    tpu.vector_store %arg6[%c0_6, %c0_7], %7 {strides = array<i32>} : memref<16x192xf32, #tpu.memory_space<vmem>>, vector<16x192xf32>,
    %c0_i32_8 = arith.constant 0 : i32
    %9 = arith.cmpi eq, %arg2, %c0_i32_8 : i32
    %10 = arith.extui %9 : i1 to i32
    %c0_i32_9 = arith.constant 0 : i32
    %11 = arith.cmpi ne, %10, %c0_i32_9 : i32
    scf.if %11 {
      %c0_10 = arith.constant 0 : index
      %c0_11 = arith.constant 0 : index
      %12 = vector.load %arg6[%c0_10, %c0_11] : memref<16x192xf32, #tpu.memory_space<vmem>>, vector<16x192xf32>
      %c0_12 = arith.constant 0 : index
      %c0_13 = arith.constant 0 : index
      %13 = vector.load %arg5[%c0_12, %c0_13] : memref<16x192xf32, #tpu.memory_space<vmem>>, vector<16x192xf32>
      tpu.vector_store %arg5[%c0_12, %c0_13], %12 {strides = array<i32>} : memref<16x192xf32, #tpu.memory_space<vmem>>, vector<16x192xf32>,
    } else {
    }
    return
  }
  func.func @transform_0(%arg0: i32, %arg1: i32, %arg2: i32) -> (i32, i32) {
    %c0_i32 = arith.constant 0 : i32
    return %arg0, %arg2 : i32, i32
  }
  func.func @transform_1(%arg0: i32, %arg1: i32, %arg2: i32) -> (i32, i32) {
    %c0_i32 = arith.constant 0 : i32
    return %arg2, %arg1 : i32, i32
  }
  func.func @transform_2(%arg0: i32, %arg1: i32, %arg2: i32) -> (i32, i32) {
    %c0_i32 = arith.constant 0 : i32
    return %arg0, %arg1 : i32, i32
  }
}

</mosaic_0001>

<llo_original>
// kernel: tpu_custom_call.1
$region0: #{tpu_custom_call.1}
  #allocation0 [shape = 'u32[]', space=smem, size = 0x4, offset = 0x4, fixed_abs, tag = 'smem constant byte address 0x4 - core index']
  #allocation1 [shape = 'u32[144,128]{1,0:T(1,128)}', space=vmem, size = 0x12000, scoped, tag = 'internal scratch']
  #allocation2 [shape = 'f32[16,192]{1,0:T(8,128)}', space=vmem, size = 0x4000, scoped, tag = 'scratch operand']
  %s0 = inlined_call_operand.hbm [shape: f32[16,32], index: 0, kind: input, shape index: {}]
  %s1 = inlined_call_operand.hbm [shape: f32[32,192], index: 1, kind: input, shape index: {}]
  %s2 = inlined_call_operand.hbm [shape: f32[16,192], index: 2, kind: output, shape index: {}]
  %s3 = sld [smem:[#allocation0]]
  $region34: #{tpu_custom_call.1} parent=0
    _
  %s5 = ssub.s32 1, %s3
  %s6 = scalar_select 0, %s5, %s3
  $region1: #{tpu_custom_call.1} parent=0
    #allocation3 [shape = 'u8[8192]{0}', space=vmem, size = 0x2000, scoped, tag = 'input window, operand 0, single buffered']
    #allocation4 [shape = 's32[1]{0}', space=sflag, size = 0x4, scoped, tag = 'scoped memory for tpu_custom_call.1']
    #allocation5 [shape = 's32[1]{0}', space=sflag, size = 0x4, scoped, tag = 'scoped memory for tpu_custom_call.1']
    #allocation6 [shape = 'u8[32768]{0}', space=vmem, size = 0x8000, scoped, tag = 'input window, operand 1, single buffered']
    #allocation7 [shape = 's32[1]{0}', space=sflag, size = 0x4, scoped, tag = 'scoped memory for tpu_custom_call.1']
    #allocation8 [shape = 'u8[16384]{0}', space=vmem, size = 0x4000, scoped, tag = 'output window, operand 0, single buffered']
    %7 = vsyncpa [#allocation4], 0
    %8 = vsyncpa [#allocation7], 0
    %9 = vsyncpa [#allocation5], 0
    // Predicated region
    $region2: #{tpu_custom_call.1} parent=1 // pred_check
      _
    $region3: #{tpu_custom_call.1} parent=1 // pred_check_branch
      %11 = sbr.rel (0) target = $region5
    $region4: #{tpu_custom_call.1} parent=1 // pred_region
      %s13 = ssub.s32 256, 256
      %14 = vsyncadd [#allocation4], %s13
      %s15 = sshll.u32 [#allocation3], 4
      %s16 = int_to_ptr.vmem [resolvable:$true] %s15
      %21 = dma.hbm_to_vmem [thread:$0]  %s0, 256, %s16, [#allocation4], 128, 128, 8
    $region5: #{tpu_custom_call.1} parent=1 // pred_fallthru
      _
    // Predicated region
    $region6: #{tpu_custom_call.1} parent=1 // pred_check
      _
    $region7: #{tpu_custom_call.1} parent=1 // pred_check_branch
      %23 = sbr.rel (0) target = $region9
    $region8: #{tpu_custom_call.1} parent=1 // pred_region
      %s25 = ssub.s32 1024, 1024
      %26 = vsyncadd [#allocation7], %s25
      %s27 = sshll.u32 [#allocation6], 4
      %s28 = int_to_ptr.vmem [resolvable:$true] %s27
      %33 = dma.hbm_to_vmem [thread:$0]  %s1, 1024, %s28, [#allocation7], 256, 256, 16
    $region9: #{tpu_custom_call.1} parent=1 // pred_fallthru
      _
    // Predicated region
    $region10: #{tpu_custom_call.1} parent=1 // pred_check
      _
    $region11: #{tpu_custom_call.1} parent=1 // pred_check_branch
      %35 = sbr.rel (0) target = $region13
    $region12: #{tpu_custom_call.1} parent=1 // pred_region
      %36 = dma.done [#allocation4], 256
    $region13: #{tpu_custom_call.1} parent=1 // pred_fallthru
      _
    // Predicated region
    $region14: #{tpu_custom_call.1} parent=1 // pred_check
      _
    $region15: #{tpu_custom_call.1} parent=1 // pred_check_branch
      %38 = sbr.rel (0) target = $region17
    $region16: #{tpu_custom_call.1} parent=1 // pred_region
      %39 = dma.done [#allocation7], 1024
    $region17: #{tpu_custom_call.1} parent=1 // pred_fallthru
      _
    %p40 = scmp.eq.s32.totalorder 0, 0
    // Predicated region
    $region18: #{tpu_custom_call.1} parent=1 // pred_check
      %p41 = pneg %p40
    $region19: #{tpu_custom_call.1} parent=1 // pred_check_branch
      %43 = sbr.rel (%p41) target = $region21
    $region20: #{tpu_custom_call.1} parent=1 // pred_region
      %44 = vst [vmem:[#allocation2] sm:$0xff] 0.0
      %vm45 = vcmask 523264
      %46 = vst.msk [vmem:[#allocation2 + $0x8] sm:$0xff] %vm45, 0.0
      %47 = vst [vmem:[#allocation2 + $0x10] sm:$0xff] 0.0
      %48 = vst.msk [vmem:[#allocation2 + $0x18] sm:$0xff] %vm45, 0.0
    $region21: #{tpu_custom_call.1} parent=1 // pred_fallthru
      _
    %v49 = vld [vmem:[#allocation2] sm:$0xff]
    %v50 = vld [vmem:[#allocation2 + $0x8] sm:$0xff]
    %v51 = vld [vmem:[#allocation2 + $0x10] sm:$0xff]
    %v52 = vld [vmem:[#allocation2 + $0x18] sm:$0xff]
    %v53 = vld [vmem:[#allocation3] sm:$0xff]
    %v54 = vld [vmem:[#allocation3 + $0x8] sm:$0xff]
    %v55 = vld [vmem:[#allocation6] sm:$0xff]
    %v56 = vld [vmem:[#allocation6 + $0x8] sm:$0xff]
    %v57 = vld [vmem:[#allocation6 + $0x10] sm:$0xff]
    %v58 = vld [vmem:[#allocation6 + $0x18] sm:$0xff]
    %v59 = vld [vmem:[#allocation6 + $0x20] sm:$0xff]
    %v60 = vld [vmem:[#allocation6 + $0x28] sm:$0xff]
    %v61 = vld [vmem:[#allocation6 + $0x30] sm:$0xff]
    %v62 = vld [vmem:[#allocation6 + $0x38] sm:$0xff]
    %vm63 = vcmask 261120
    %v65 = vsel %vm63, %v53, 0
    %v68 = vsel %vm63, %v54, 0
    %70 = vmatprep.subr.mxu0 0.0
    %71 = vmatpush1.msra.mxu0 0.0
    %72 = vmatprep.subr.mxu0 0.0
    %73 = vmatpush1.msra.mxu0 0.0
    %74 = vmatprep.subr.mxu0 0.0
    %75 = vmatpush1.msra.mxu0 0.0
    %76 = vmatprep.subr.mxu0 0.0
    %77 = vmatpush1.msra.mxu0 0.0
    %78 = vmatprep.subr.mxu0 0.0
    %79 = vmatpush1.msra.mxu0 0.0
    %80 = vmatprep.subr.mxu0 0.0
    %81 = vmatpush1.msra.mxu0 0.0
    %82 = vmatprep.subr.mxu0 0.0
    %83 = vmatpush1.msra.mxu0 0.0
    %84 = vmatprep.subr.mxu0 0.0
    %85 = vmatpush1.msra.mxu0 0.0
    %86 = vmatprep.subr.mxu0 0.0
    %87 = vmatpush1.msra.mxu0 0.0
    %88 = vmatprep.subr.mxu0 0.0
    %89 = vmatpush1.msra.mxu0 0.0
    %90 = vmatprep.subr.mxu0 0.0
    %91 = vmatpush1.msra.mxu0 0.0
    %92 = vmatprep.subr.mxu0 0.0
    %93 = vmatpush1.msra.mxu0 0.0
    %94 = vmatprep.subr.mxu0 %v62
    %95 = vmatpush1.msra.mxu0 %v61
    %96 = vmatprep.subr.mxu0 %v60
    %97 = vmatpush1.msra.mxu0 %v59
    %98 = vmatprep.subr.mxu0 %v58
    %99 = vmatpush1.msra.mxu0 %v57
    %100 = vmatprep.subr.mxu0 %v56
    %101 = vmatpush1.msra.mxu0 %v55
    %102 = vmatprep.subr.mxu0 0.0
    %103 = vmatpush2.msra.mxu0 0.0
    %104 = vmatprep.subr.mxu0 0.0
    %105 = vmatpush2.msra.mxu0 0.0
    %106 = vmatprep.subr.mxu0 0.0
    %107 = vmatpush2.msra.mxu0 0.0
    %108 = vmatprep.subr.mxu0 0.0
    %109 = vmatpush2.msra.mxu0 0.0
    %110 = vmatprep.subr.mxu0 0.0
    %111 = vmatpush2.msra.mxu0 0.0
    %112 = vmatprep.subr.mxu0 0.0
    %113 = vmatpush2.msra.mxu0 0.0
    %114 = vmatprep.subr.mxu0 0.0
    %115 = vmatpush2.msra.mxu0 0.0
    %116 = vmatprep.subr.mxu0 0.0
    %117 = vmatpush2.msra.mxu0 0.0
    %118 = vmatprep.subr.mxu0 0.0
    %119 = vmatpush2.msra.mxu0 0.0
    %120 = vmatprep.subr.mxu0 0.0
    %121 = vmatpush2.msra.mxu0 0.0
    %122 = vmatprep.subr.mxu0 0.0
    %123 = vmatpush2.msra.mxu0 0.0
    %124 = vmatprep.subr.mxu0 0.0
    %125 = vmatpush2.msra.mxu0 0.0
    %126 = vmatprep.subr.mxu0 0.0
    %127 = vmatpush2.msra.mxu0 0.0
    %128 = vmatprep.subr.mxu0 0.0
    %129 = vmatpush2.msra.mxu0 0.0
    %130 = vmatprep.subr.mxu0 0.0
    %131 = vmatpush2.msra.mxu0 0.0
    %132 = vmatprep.subr.mxu0 0.0
    %133 = vmatpush2.msra.mxu0 0.0
    %134 = vmatprep.mubr.f32.mxu0 0.0
    %135 = vmatmul.mubr.f32.gmra.mxu0 %v65
    %v136 = vpop.f32.mrf.mxu0
    %v137 = vadd.f32 0.0, %v136
    %v138 = vpop.f32.mrf.mxu0
    %v139 = vadd.f32 0.0, %v138
    %140 = vmatprep.mubr.f32.mxu0 0.0
    %141 = vmatmul.mubr.f32.gmra.mxu0 %v68
    %v142 = vpop.f32.mrf.mxu0
    %v143 = vadd.f32 0.0, %v142
    %v144 = vpop.f32.mrf.mxu0
    %v145 = vadd.f32 0.0, %v144
    %146 = vdwg.mxu0
    %v147 = vadd.f32 %v49, %v137
    %v148 = vadd.f32 %v50, %v139
    %v149 = vadd.f32 %v51, %v143
    %v150 = vadd.f32 %v52, %v145
    %151 = vst [vmem:[#allocation2] sm:$0xff] %v147
    %vm152 = vcmask 523264
    %153 = vst.msk [vmem:[#allocation2 + $0x8] sm:$0xff] %vm152, %v148
    %154 = vst [vmem:[#allocation2 + $0x10] sm:$0xff] %v149
    %155 = vst.msk [vmem:[#allocation2 + $0x18] sm:$0xff] %vm152, %v150
    // Predicated region
    $region22: #{tpu_custom_call.1} parent=1 // pred_check
      %p156 = pneg %p40
    $region23: #{tpu_custom_call.1} parent=1 // pred_check_branch
      %158 = sbr.rel (%p156) target = $region25
    $region24: #{tpu_custom_call.1} parent=1 // pred_region
      %v159 = vld [vmem:[#allocation2] sm:$0xff]
      %v160 = vld [vmem:[#allocation2 + $0x8] sm:$0xff]
      %v161 = vld [vmem:[#allocation2 + $0x10] sm:$0xff]
      %v162 = vld [vmem:[#allocation2 + $0x18] sm:$0xff]
      %163 = vst [vmem:[#allocation8] sm:$0xff] %v159
      %164 = vst.msk [vmem:[#allocation8 + $0x8] sm:$0xff] %vm152, %v160
      %165 = vst [vmem:[#allocation8 + $0x10] sm:$0xff] %v161
      %166 = vst.msk [vmem:[#allocation8 + $0x18] sm:$0xff] %vm152, %v162
    $region25: #{tpu_custom_call.1} parent=1 // pred_fallthru
      _
    // Predicated region
    $region26: #{tpu_custom_call.1} parent=1 // pred_check
      _
    $region27: #{tpu_custom_call.1} parent=1 // pred_check_branch
      %168 = sbr.rel (0) target = $region29
    $region28: #{tpu_custom_call.1} parent=1 // pred_region
      %s170 = ssub.s32 512, 512
      %171 = vsyncadd [#allocation5], %s170
      %s172 = sshll.u32 [#allocation8], 4
      %s173 = int_to_ptr.vmem [resolvable:$true] %s172
      %178 = dma.vmem_to_hbm [thread:$0]  %s173, 512, %s2, [#allocation5], 256, 256, 16
    $region29: #{tpu_custom_call.1} parent=1 // pred_fallthru
      _
    // Predicated region
    $region30: #{tpu_custom_call.1} parent=1 // pred_check
      _
    $region31: #{tpu_custom_call.1} parent=1 // pred_check_branch
      %180 = sbr.rel (0) target = $region33
    $region32: #{tpu_custom_call.1} parent=1 // pred_region
      %181 = dma.done [#allocation5], 512
    $region33: #{tpu_custom_call.1} parent=1 // pred_fallthru
      _
    %182 = vsyncpa [#allocation4], 1
    %183 = vsyncpa [#allocation7], 1
    %184 = vsyncpa [#allocation5], 1

</llo_original>
